<compile_context>
chip_gen: v7x
topology: tpu7x:2x2x1
jax: 0.10.0
libtpu: 0.0.40
codegen_flags: <defaults>
</compile_context>

<pallas_src>
import numpy as np
import jax
import jax.numpy as jnp
from jax import lax
from jax.experimental import pallas as pl
from jax.experimental.pallas import tpu as pltpu


_HALO = 8   # sublane-aligned W offset of the interior inside the halo scratch


def _dwconv_kernel(x_ref, w_ref, b_ref, o_ref, xp_ref):
    # x_ref : (Bt, H, W, C)              unpadded input tile (NHWC), C on lanes
    # w_ref : (9, C)                     tap-major depthwise weights
    # b_ref : (1, C)                     bias
    # o_ref : (Bt, H, W, C)
    # xp_ref: (H+2, W+2*_HALO, C) f32    zero-halo scratch, reused per image
    Bt, H, W, C = o_ref.shape

    # Zero the halo scratch once per grid step.  The interior is overwritten
    # for every image below; the zero ring around it is the conv padding.
    xp_ref[...] = jnp.zeros_like(xp_ref)

    w = w_ref[...].astype(jnp.float32)        # (9, C)
    bias = b_ref[...].astype(jnp.float32)     # (1, C)

    def one_image(b, carry):
        # Copy image b into the scratch interior.  W offset _HALO is a
        # multiple of 8, so this store stays sublane-tile aligned; the H
        # offset 1 is on a major dim (just a base-address change).
        xp_ref[1:H + 1, _HALO:_HALO + W, :] = x_ref[b].astype(jnp.float32)

        # Depthwise 3x3 = 9 shifted elementwise FMAs on the VPU (lane = C).
        acc = jnp.broadcast_to(bias, (H, W, C))
        for dh in range(3):
            for dw in range(3):
                t = dh * 3 + dw
                ws = _HALO - 1 + dw
                acc = acc + xp_ref[dh:dh + H, ws:ws + W, :] * w[t:t + 1, :]

        o_ref[b] = acc.astype(o_ref.dtype)
        return carry

    lax.fori_loop(0, Bt, one_image, 0, unroll=True)


def dwconv_pallas(x, conv_w, conv_b, *, H, W, block_b=None,
                  vmem_budget_bytes=8 << 20):
    """Depthwise 3x3 conv over tokens.  x: (B, N, C) with N == H*W;
    conv_w: (C, 1, 3, 3); conv_b: (C,).  Returns (B, N, C)."""
    B, N, C = x.shape
    assert N == H * W, "N must equal H * W"
    dtype = x.dtype
    itemsize = dtype.itemsize

    # Lane-dense channels: pad C up to a multiple of 128 so every output store
    # is a full, unmasked vreg store (no-op when C is already 128-aligned).
    Cp = max(128, ((C + 127) // 128) * 128)

    x_nhwc = x.reshape(B, H, W, C)
    w_taps = conv_w.reshape(C, 9).T                       # (9, C), tap-major
    bias = conv_b.reshape(1, C)
    if Cp != C:
        x_nhwc = jnp.pad(x_nhwc, ((0, 0), (0, 0), (0, 0), (0, Cp - C)))
        w_taps = jnp.pad(w_taps, ((0, 0), (0, Cp - C)))
        bias = jnp.pad(bias, ((0, 0), (0, Cp - C)))

    # Block-size selection: aim for two large grid steps (feeds both v7x
    # TensorCores; on single-core v5e/v6e it just means ~2 grid-step overheads
    # for the whole batch), bounded by a conservative VMEM budget accounting
    # for double-buffered in/out blocks plus the halo scratch.
    per_image_bytes = 2 * H * W * Cp * itemsize           # in + out per image
    scratch_bytes = (H + 2) * (W + 2 * _HALO) * Cp * 4
    if block_b is None:
        block_b = 1
        target = max(1, (B + 1) // 2)
        for bt in range(target, 0, -1):
            if (B % bt == 0 and
                    2 * bt * per_image_bytes + scratch_bytes <= vmem_budget_bytes):
                block_b = bt
                break
    assert B % block_b == 0
    grid_b = B // block_b

    flops = (2 * 9 + 1) * B * H * W * Cp
    bytes_accessed = itemsize * 2 * B * H * W * Cp + 4 * 10 * Cp

    out = pl.pallas_call(
        _dwconv_kernel,
        out_shape=jax.ShapeDtypeStruct((B, H, W, Cp), dtype),
        grid_spec=pltpu.PrefetchScalarGridSpec(
            num_scalar_prefetch=0,
            grid=(grid_b,),
            in_specs=[
                pl.BlockSpec((block_b, H, W, Cp), lambda i: (i, 0, 0, 0)),
                pl.BlockSpec((9, Cp), lambda i: (0, 0)),
                pl.BlockSpec((1, Cp), lambda i: (0, 0)),
            ],
            out_specs=pl.BlockSpec((block_b, H, W, Cp), lambda i: (i, 0, 0, 0)),
            scratch_shapes=[
                pltpu.VMEM((H + 2, W + 2 * _HALO, Cp), jnp.float32),
            ],
        ),
        compiler_params=pltpu.CompilerParams(
            dimension_semantics=("parallel",)),
        cost_estimate=pl.CostEstimate(
            flops=flops, transcendentals=0, bytes_accessed=bytes_accessed),
    )(x_nhwc, w_taps, bias)

    out = out.reshape(B, N, Cp)
    if Cp != C:
        out = out[:, :, :C]
    return out


def dwconv_reference(x, conv_w, conv_b, *, H, W):
    """Plain-JAX mirror of the PyTorch forward (independent correctness check)."""
    B, N, C = x.shape
    tx = jnp.transpose(x, (0, 2, 1)).reshape(B, C, H, W)
    y = lax.conv_general_dilated(
        tx, conv_w, window_strides=(1, 1), padding=((1, 1), (1, 1)),
        feature_group_count=C,
        dimension_numbers=("NCHW", "OIHW", "NCHW"))
    y = y + conv_b.reshape(1, C, 1, 1)
    return jnp.transpose(y.reshape(B, C, N), (0, 2, 1))


if __name__ == "__main__":
    B = 2
    H, W = 8, 16
    N = H * W          # 128 tokens
    C = 128            # channel dim sits on the 128-lane axis (lane-dense)

    key = jax.random.PRNGKey(0)
    k_x, k_w, k_b = jax.random.split(key, 3)
    x = jax.random.normal(k_x, (B, N, C), dtype=jnp.float32)
    conv_w = jax.random.normal(k_w, (C, 1, 3, 3), dtype=jnp.float32) / 3.0
    conv_b = 0.05 * jax.random.normal(k_b, (C,), dtype=jnp.float32)

    out = dwconv_pallas(x, conv_w, conv_b, H=H, W=W)
    out = jax.block_until_ready(out)

    ref = dwconv_reference(x, conv_w, conv_b, H=H, W=W)
    ref = jax.block_until_ready(ref)

    assert out.shape == (B, N, C)
    np.testing.assert_allclose(np.asarray(out), np.asarray(ref),
                               rtol=1e-5, atol=1e-5)
    print("KERNEL_OK")
</pallas_src>

<mosaic_0001>
module attributes {stable_mosaic.version = 11 : i64} {
  func.func @_dwconv_kernel(%arg0: i32, %arg1: memref<1x8x16x128xf32, #tpu.memory_space<vmem>>, %arg2: memref<9x128xf32, #tpu.memory_space<vmem>>, %arg3: memref<1x128xf32, #tpu.memory_space<vmem>>, %arg4: memref<1x8x16x128xf32, #tpu.memory_space<vmem>>, %arg5: memref<10x32x128xf32, #tpu.memory_space<vmem>>) attributes {dimension_semantics = [#tpu.dimension_semantics<parallel>], iteration_bounds = array<i64: 2>, scalar_prefetch = 0 : i64, scratch_operands = 1 : i64, tpu.core_type = #tpu.core_type<tc>, window_params = [{transform_indices = @transform_0, window_bounds = array<i64: 1, 8, 16, 128>}, {pipeline_mode = #tpu.pipeline_mode<synchronous>, transform_indices = @transform_1, window_bounds = array<i64: 9, 128>}, {pipeline_mode = #tpu.pipeline_mode<synchronous>, transform_indices = @transform_2, window_bounds = array<i64: 1, 128>}, {transform_indices = @transform_3, window_bounds = array<i64: 1, 8, 16, 128>}]} {
    %cst = arith.constant 0.000000e+00 : f32
    %0 = vector.broadcast %cst : f32 to vector<10x32x128xf32>
    %c0 = arith.constant 0 : index
    %c0_0 = arith.constant 0 : index
    %c0_1 = arith.constant 0 : index
    %1 = vector.load %arg5[%c0, %c0_0, %c0_1] : memref<10x32x128xf32, #tpu.memory_space<vmem>>, vector<10x32x128xf32>
    tpu.vector_store %arg5[%c0, %c0_0, %c0_1], %0 {strides = array<i32>} : memref<10x32x128xf32, #tpu.memory_space<vmem>>, vector<10x32x128xf32>,
    %c0_2 = arith.constant 0 : index
    %c0_3 = arith.constant 0 : index
    %2 = vector.load %arg2[%c0_2, %c0_3] : memref<9x128xf32, #tpu.memory_space<vmem>>, vector<9x128xf32>
    %c0_4 = arith.constant 0 : index
    %c0_5 = arith.constant 0 : index
    %3 = vector.load %arg3[%c0_4, %c0_5] : memref<1x128xf32, #tpu.memory_space<vmem>>, vector<1x128xf32>
    %c0_i32 = arith.constant 0 : i32
    %4 = arith.index_cast %c0_i32 : i32 to index
    %c0_6 = arith.constant 0 : index
    %c0_7 = arith.constant 0 : index
    %c0_8 = arith.constant 0 : index
    %5 = vector.load %arg1[%4, %c0_6, %c0_7, %c0_8] : memref<1x8x16x128xf32, #tpu.memory_space<vmem>>, vector<1x8x16x128xf32>
    %6 = vector.shape_cast %5 : vector<1x8x16x128xf32> to vector<8x16x128xf32>
    %c1 = arith.constant 1 : index
    %c8 = arith.constant 8 : index
    %c0_9 = arith.constant 0 : index
    %7 = vector.load %arg5[%c1, %c8, %c0_9] : memref<10x32x128xf32, #tpu.memory_space<vmem>>, vector<8x16x128xf32>
    tpu.vector_store %arg5[%c1, %c8, %c0_9], %6 {strides = array<i32>} : memref<10x32x128xf32, #tpu.memory_space<vmem>>, vector<8x16x128xf32>,
    %8 = vector.shape_cast %3 : vector<1x128xf32> to vector<1x1x128xf32>
    %9 = vector.broadcast %8 : vector<1x1x128xf32> to vector<8x16x128xf32>
    %c0_10 = arith.constant 0 : index
    %c7 = arith.constant 7 : index
    %c0_11 = arith.constant 0 : index
    %10 = vector.load %arg5[%c0_10, %c7, %c0_11] : memref<10x32x128xf32, #tpu.memory_space<vmem>>, vector<8x16x128xf32>
    %11 = vector.extract_strided_slice %2 {offsets = [0, 0], sizes = [1, 128], strides = [1, 1]} : vector<9x128xf32> to vector<1x128xf32>
    %12 = vector.shape_cast %11 : vector<1x128xf32> to vector<1x1x128xf32>
    %13 = vector.broadcast %12 : vector<1x1x128xf32> to vector<8x16x128xf32>
    %14 = arith.mulf %10, %13 : vector<8x16x128xf32>
    %15 = arith.addf %9, %14 : vector<8x16x128xf32>
    %c0_12 = arith.constant 0 : index
    %c8_13 = arith.constant 8 : index
    %c0_14 = arith.constant 0 : index
    %16 = vector.load %arg5[%c0_12, %c8_13, %c0_14] : memref<10x32x128xf32, #tpu.memory_space<vmem>>, vector<8x16x128xf32>
    %17 = vector.extract_strided_slice %2 {offsets = [1, 0], sizes = [1, 128], strides = [1, 1]} : vector<9x128xf32> to vector<1x128xf32>
    %18 = vector.shape_cast %17 : vector<1x128xf32> to vector<1x1x128xf32>
    %19 = vector.broadcast %18 : vector<1x1x128xf32> to vector<8x16x128xf32>
    %20 = arith.mulf %16, %19 : vector<8x16x128xf32>
    %21 = arith.addf %15, %20 : vector<8x16x128xf32>
    %c0_15 = arith.constant 0 : index
    %c9 = arith.constant 9 : index
    %c0_16 = arith.constant 0 : index
    %22 = vector.load %arg5[%c0_15, %c9, %c0_16] : memref<10x32x128xf32, #tpu.memory_space<vmem>>, vector<8x16x128xf32>
    %23 = vector.extract_strided_slice %2 {offsets = [2, 0], sizes = [1, 128], strides = [1, 1]} : vector<9x128xf32> to vector<1x128xf32>
    %24 = vector.shape_cast %23 : vector<1x128xf32> to vector<1x1x128xf32>
    %25 = vector.broadcast %24 : vector<1x1x128xf32> to vector<8x16x128xf32>
    %26 = arith.mulf %22, %25 : vector<8x16x128xf32>
    %27 = arith.addf %21, %26 : vector<8x16x128xf32>
    %c1_17 = arith.constant 1 : index
    %c7_18 = arith.constant 7 : index
    %c0_19 = arith.constant 0 : index
    %28 = vector.load %arg5[%c1_17, %c7_18, %c0_19] : memref<10x32x128xf32, #tpu.memory_space<vmem>>, vector<8x16x128xf32>
    %29 = vector.extract_strided_slice %2 {offsets = [3, 0], sizes = [1, 128], strides = [1, 1]} : vector<9x128xf32> to vector<1x128xf32>
    %30 = vector.shape_cast %29 : vector<1x128xf32> to vector<1x1x128xf32>
    %31 = vector.broadcast %30 : vector<1x1x128xf32> to vector<8x16x128xf32>
    %32 = arith.mulf %28, %31 : vector<8x16x128xf32>
    %33 = arith.addf %27, %32 : vector<8x16x128xf32>
    %c1_20 = arith.constant 1 : index
    %c8_21 = arith.constant 8 : index
    %c0_22 = arith.constant 0 : index
    %34 = vector.load %arg5[%c1_20, %c8_21, %c0_22] : memref<10x32x128xf32, #tpu.memory_space<vmem>>, vector<8x16x128xf32>
    %35 = vector.extract_strided_slice %2 {offsets = [4, 0], sizes = [1, 128], strides = [1, 1]} : vector<9x128xf32> to vector<1x128xf32>
    %36 = vector.shape_cast %35 : vector<1x128xf32> to vector<1x1x128xf32>
    %37 = vector.broadcast %36 : vector<1x1x128xf32> to vector<8x16x128xf32>
    %38 = arith.mulf %34, %37 : vector<8x16x128xf32>
    %39 = arith.addf %33, %38 : vector<8x16x128xf32>
    %c1_23 = arith.constant 1 : index
    %c9_24 = arith.constant 9 : index
    %c0_25 = arith.constant 0 : index
    %40 = vector.load %arg5[%c1_23, %c9_24, %c0_25] : memref<10x32x128xf32, #tpu.memory_space<vmem>>, vector<8x16x128xf32>
    %41 = vector.extract_strided_slice %2 {offsets = [5, 0], sizes = [1, 128], strides = [1, 1]} : vector<9x128xf32> to vector<1x128xf32>
    %42 = vector.shape_cast %41 : vector<1x128xf32> to vector<1x1x128xf32>
    %43 = vector.broadcast %42 : vector<1x1x128xf32> to vector<8x16x128xf32>
    %44 = arith.mulf %40, %43 : vector<8x16x128xf32>
    %45 = arith.addf %39, %44 : vector<8x16x128xf32>
    %c2 = arith.constant 2 : index
    %c7_26 = arith.constant 7 : index
    %c0_27 = arith.constant 0 : index
    %46 = vector.load %arg5[%c2, %c7_26, %c0_27] : memref<10x32x128xf32, #tpu.memory_space<vmem>>, vector<8x16x128xf32>
    %47 = vector.extract_strided_slice %2 {offsets = [6, 0], sizes = [1, 128], strides = [1, 1]} : vector<9x128xf32> to vector<1x128xf32>
    %48 = vector.shape_cast %47 : vector<1x128xf32> to vector<1x1x128xf32>
    %49 = vector.broadcast %48 : vector<1x1x128xf32> to vector<8x16x128xf32>
    %50 = arith.mulf %46, %49 : vector<8x16x128xf32>
    %51 = arith.addf %45, %50 : vector<8x16x128xf32>
    %c2_28 = arith.constant 2 : index
    %c8_29 = arith.constant 8 : index
    %c0_30 = arith.constant 0 : index
    %52 = vector.load %arg5[%c2_28, %c8_29, %c0_30] : memref<10x32x128xf32, #tpu.memory_space<vmem>>, vector<8x16x128xf32>
    %53 = vector.extract_strided_slice %2 {offsets = [7, 0], sizes = [1, 128], strides = [1, 1]} : vector<9x128xf32> to vector<1x128xf32>
    %54 = vector.shape_cast %53 : vector<1x128xf32> to vector<1x1x128xf32>
    %55 = vector.broadcast %54 : vector<1x1x128xf32> to vector<8x16x128xf32>
    %56 = arith.mulf %52, %55 : vector<8x16x128xf32>
    %57 = arith.addf %51, %56 : vector<8x16x128xf32>
    %c2_31 = arith.constant 2 : index
    %c9_32 = arith.constant 9 : index
    %c0_33 = arith.constant 0 : index
    %58 = vector.load %arg5[%c2_31, %c9_32, %c0_33] : memref<10x32x128xf32, #tpu.memory_space<vmem>>, vector<8x16x128xf32>
    %59 = vector.extract_strided_slice %2 {offsets = [8, 0], sizes = [1, 128], strides = [1, 1]} : vector<9x128xf32> to vector<1x128xf32>
    %60 = vector.shape_cast %59 : vector<1x128xf32> to vector<1x1x128xf32>
    %61 = vector.broadcast %60 : vector<1x1x128xf32> to vector<8x16x128xf32>
    %62 = arith.mulf %58, %61 : vector<8x16x128xf32>
    %63 = arith.addf %57, %62 : vector<8x16x128xf32>
    %64 = arith.index_cast %c0_i32 : i32 to index
    %c0_34 = arith.constant 0 : index
    %c0_35 = arith.constant 0 : index
    %c0_36 = arith.constant 0 : index
    %65 = vector.load %arg4[%64, %c0_34, %c0_35, %c0_36] : memref<1x8x16x128xf32, #tpu.memory_space<vmem>>, vector<1x8x16x128xf32>
    %66 = vector.shape_cast %65 : vector<1x8x16x128xf32> to vector<8x16x128xf32>
    %67 = vector.shape_cast %63 : vector<8x16x128xf32> to vector<1x8x16x128xf32>
    tpu.vector_store %arg4[%64, %c0_34, %c0_35, %c0_36], %67 {strides = array<i32>} : memref<1x8x16x128xf32, #tpu.memory_space<vmem>>, vector<1x8x16x128xf32>,
    %c1_i32 = arith.constant 1 : i32
    return
  }
  func.func @transform_0(%arg0: i32) -> (i32, i32, i32, i32) {
    %c0_i32 = arith.constant 0 : i32
    %c0_i32_0 = arith.constant 0 : i32
    %c0_i32_1 = arith.constant 0 : i32
    %c0_i32_2 = arith.constant 0 : i32
    return %arg0, %c0_i32, %c0_i32_0, %c0_i32_1 : i32, i32, i32, i32
  }
  func.func @transform_1(%arg0: i32) -> (i32, i32) {
    %c0_i32 = arith.constant 0 : i32
    %c0_i32_0 = arith.constant 0 : i32
    %c0_i32_1 = arith.constant 0 : i32
    return %c0_i32, %c0_i32_0 : i32, i32
  }
  func.func @transform_2(%arg0: i32) -> (i32, i32) {
    %c0_i32 = arith.constant 0 : i32
    %c0_i32_0 = arith.constant 0 : i32
    %c0_i32_1 = arith.constant 0 : i32
    return %c0_i32, %c0_i32_0 : i32, i32
  }
  func.func @transform_3(%arg0: i32) -> (i32, i32, i32, i32) {
    %c0_i32 = arith.constant 0 : i32
    %c0_i32_0 = arith.constant 0 : i32
    %c0_i32_1 = arith.constant 0 : i32
    %c0_i32_2 = arith.constant 0 : i32
    return %arg0, %c0_i32, %c0_i32_0, %c0_i32_1 : i32, i32, i32, i32
  }
}

</mosaic_0001>

<llo_original>
// kernel: tpu_custom_call.1
$region0: #{tpu_custom_call.1}
  #allocation0 [shape = 'u32[]', space=smem, size = 0x4, offset = 0x4, fixed_abs, tag = 'smem constant byte address 0x4 - core index']
  #allocation1 [shape = 'u32[144,128]{1,0:T(1,128)}', space=vmem, size = 0x12000, scoped, tag = 'internal scratch']
  #allocation2 [shape = 'f32[10,32,128]{2,1,0:T(8,128)}', space=vmem, size = 0x28000, scoped, tag = 'scratch operand']
  %s0 = inlined_call_operand.hbm [shape: f32[2,8,16,128], index: 0, kind: input, shape index: {}]
  %s1 = inlined_call_operand.hbm [shape: f32[9,128], index: 1, kind: input, shape index: {}]
  %s2 = inlined_call_operand.vmem [shape: f32[1,128], index: 2, kind: input, shape index: {}]
  %s3 = inlined_call_operand.hbm [shape: f32[2,8,16,128], index: 3, kind: output, shape index: {}]
  %s4 = sld [smem:[#allocation0]]
  $region53: #{tpu_custom_call.1} parent=0
    _
  %s6 = ssub.s32 1, %s4
  %s7 = scalar_select 0, %s6, %s4
  $region1: #{tpu_custom_call.1} parent=0
    #allocation3 [shape = 'u8[131072]{0}', space=vmem, size = 0x20000, scoped, tag = 'input window, operand 0']
    #allocation4 [shape = 's32[2]{0}', space=sflag, size = 0x8, scoped, tag = 'scoped memory for tpu_custom_call.1']
    #allocation5 [shape = 's32[2]{0}', space=sflag, size = 0x8, scoped, tag = 'scoped memory for tpu_custom_call.1']
    #allocation6 [shape = 'u8[8192]{0}', space=vmem, size = 0x2000, scoped, tag = 'input window, operand 1, single buffered']
    #allocation7 [shape = 's32[1]{0}', space=sflag, size = 0x4, scoped, tag = 'scoped memory for tpu_custom_call.1']
    #allocation8 [shape = 'u8[131072]{0}', space=vmem, size = 0x20000, scoped, tag = 'output window, operand 0']
    %8 = vsyncpa [#allocation4], 0
    %s9 = scalar_lea.sflag [#allocation4], 1
    %10 = vsyncpa %s9, 0
    %11 = vsyncpa [#allocation7], 0
    %12 = vsyncpa [#allocation5], 0
    %s13 = scalar_lea.sflag [#allocation5], 1
    %14 = vsyncpa %s13, 0
    loop: start=0, step=1, limit=4
    $region2: #{tpu_custom_call.1} parent=1 // loop_pre_header
      _
    $region3: #{tpu_custom_call.1} parent=1 // loop_header
      %s16 = sphi 0, %s20
      %p17 = scmp.ge.s32.totalorder %s16, 4
      %s26 = sphi 0, %s28
      %s29 = sphi 0, %s26
      %s30 = sphi 0, %s29
      %s46 = sphi 0, %s30
      %s50 = sphi 0, %s50
      %s52 = sphi 0, %s50
      %s53 = sphi 0, %s52
      %s67 = sphi 0, %s53
      %s71 = sphi 0, %s71
      %s73 = sphi 0, %s71
      %s74 = sphi 0, %s73
      %s88 = sphi 0, %s74
      %s94 = sphi 0, %s96
      %s97 = sphi 0, %s94
      %s98 = sphi 0, %s97
      %s114 = sphi 0, %s98
    $region4: #{tpu_custom_call.1} parent=1 // loop_header_branch
      %19 = sbr.rel (%p17) target = $region8
    $region5: #{tpu_custom_call.1} parent=1 // loop_body
      %s21 = ssub.s32 %s16, 1
      %s22 = ssub.s32 %s16, 2
      %s23 = sadd.s32 %s16, 1
      %s24 = ssub.s32 %s16, %s23
      %p25 = scmp.eq.s32.totalorder %s24, 0
      %s27 = sadd.s32 %s26, 1
      %s28 = scalar_select %p25, %s26, %s27
      %p31 = pneg %p25
      %p32 = scmp.eq.s32.totalorder %s16, 1
      %p33 = por %p31, %p32
      %p34 = scmp.ne.s32.totalorder %s26, %s29
      %p35 = scmp.eq.s32.totalorder %s16, 0
      %p36 = por %p34, %p35
      %p37 = scmp.ne.s32.totalorder %s26, %s29
      %p38 = scmp.eq.s32.totalorder %s21, 1
      %p39 = por %p37, %p38
      %p40 = scmp.ne.s32.totalorder %s29, %s30
      %p41 = scmp.eq.s32.totalorder %s21, 0
      %p42 = por %p40, %p41
      %p43 = scmp.ne.s32.totalorder %s29, %s30
      %p44 = scmp.eq.s32.totalorder %s22, 1
      %p45 = por %p43, %p44
      %p47 = scmp.ne.s32.totalorder %s30, %s46
      %p48 = scmp.eq.s32.totalorder %s22, 0
      %p49 = por %p47, %p48
      %s51 = sadd.s32 %s50, 1
      %p54 = scmp.eq.s32.totalorder %s16, 1
      %p55 = scmp.ne.s32.totalorder %s50, %s52
      %p56 = scmp.eq.s32.totalorder %s16, 0
      %p57 = por %p55, %p56
      %p58 = scmp.ne.s32.totalorder %s50, %s52
      %p59 = scmp.eq.s32.totalorder %s21, 1
      %p60 = por %p58, %p59
      %p61 = scmp.ne.s32.totalorder %s52, %s53
      %p62 = scmp.eq.s32.totalorder %s21, 0
      %p63 = por %p61, %p62
      %p64 = scmp.ne.s32.totalorder %s52, %s53
      %p65 = scmp.eq.s32.totalorder %s22, 1
      %p66 = por %p64, %p65
      %p68 = scmp.ne.s32.totalorder %s53, %s67
      %p69 = scmp.eq.s32.totalorder %s22, 0
      %p70 = por %p68, %p69
      %s72 = sadd.s32 %s71, 1
      %p75 = scmp.eq.s32.totalorder %s16, 1
      %p76 = scmp.ne.s32.totalorder %s71, %s73
      %p77 = scmp.eq.s32.totalorder %s16, 0
      %p78 = por %p76, %p77
      %p79 = scmp.ne.s32.totalorder %s71, %s73
      %p80 = scmp.eq.s32.totalorder %s21, 1
      %p81 = por %p79, %p80
      %p82 = scmp.ne.s32.totalorder %s73, %s74
      %p83 = scmp.eq.s32.totalorder %s21, 0
      %p84 = por %p82, %p83
      %p85 = scmp.ne.s32.totalorder %s73, %s74
      %p86 = scmp.eq.s32.totalorder %s22, 1
      %p87 = por %p85, %p86
      %p89 = scmp.ne.s32.totalorder %s74, %s88
      %p90 = scmp.eq.s32.totalorder %s22, 0
      %p91 = por %p89, %p90
      %s92 = ssub.s32 %s16, %s23
      %p93 = scmp.eq.s32.totalorder %s92, 0
      %s95 = sadd.s32 %s94, 1
      %s96 = scalar_select %p93, %s94, %s95
      %p99 = pneg %p93
      %p100 = scmp.eq.s32.totalorder %s16, 1
      %p101 = por %p99, %p100
      %p102 = scmp.ne.s32.totalorder %s94, %s97
      %p103 = scmp.eq.s32.totalorder %s16, 0
      %p104 = por %p102, %p103
      %p105 = scmp.ne.s32.totalorder %s94, %s97
      %p106 = scmp.eq.s32.totalorder %s21, 1
      %p107 = por %p105, %p106
      %p108 = scmp.ne.s32.totalorder %s97, %s98
      %p109 = scmp.eq.s32.totalorder %s21, 0
      %p110 = por %p108, %p109
      %p111 = scmp.ne.s32.totalorder %s97, %s98
      %p112 = scmp.eq.s32.totalorder %s22, 1
      %p113 = por %p111, %p112
      %p115 = scmp.ne.s32.totalorder %s98, %s114
      %p116 = scmp.eq.s32.totalorder %s22, 0
      %p117 = por %p115, %p116
      %p118 = scmp.le.s32.totalorder 1, %s16
      %p119 = scmp.lt.s32.totalorder %s16, 3
      %p120 = pnand %p118, %p119
      %p121 = pneg %p120
      // Predicated region
      $region9: #{tpu_custom_call.1} parent=5 // pred_check
        _
      $region10: #{tpu_custom_call.1} parent=5 // pred_check_branch
        %123 = sbr.rel (%p120) target = $region12
      $region11: #{tpu_custom_call.1} parent=5 // pred_region
        %s124 = ssub.s32 %s16, 1
        // Predicated region
        $region13: #{tpu_custom_call.1} parent=11 // pred_check
          %p125 = pneg %p63
        $region14: #{tpu_custom_call.1} parent=11 // pred_check_branch
          %127 = sbr.rel (%p125) target = $region16
        $region15: #{tpu_custom_call.1} parent=11 // pred_region
          %s129 = ssub.s32 256, 256
          %130 = vsyncadd [#allocation7], %s129
          %s131 = sshll.u32 [#allocation6], 4
          %s132 = int_to_ptr.vmem [resolvable:$true] %s131
          %137 = dma.hbm_to_vmem [thread:$0]  %s1, 256, %s132, [#allocation7], 128, 128, 8
        $region16: #{tpu_custom_call.1} parent=11 // pred_fallthru
          _
        // Predicated region
        $region17: #{tpu_custom_call.1} parent=11 // pred_check
          %p138 = pneg %p84
        $region18: #{tpu_custom_call.1} parent=11 // pred_check_branch
          %140 = sbr.rel (%p138) target = $region20
        $region19: #{tpu_custom_call.1} parent=11 // pred_region
          _
        $region20: #{tpu_custom_call.1} parent=11 // pred_fallthru
          _
      $region12: #{tpu_custom_call.1} parent=5 // pred_fallthru
        _
      %p141 = scmp.lt.s32.totalorder %s16, 2
      // Predicated region
      $region21: #{tpu_custom_call.1} parent=5 // pred_check
        %p142 = pneg %p141
      $region22: #{tpu_custom_call.1} parent=5 // pred_check_branch
        %144 = sbr.rel (%p142) target = $region24
      $region23: #{tpu_custom_call.1} parent=5 // pred_region
        // Predicated region
        $region25: #{tpu_custom_call.1} parent=23 // pred_check
          %p145 = pneg %p36
        $region26: #{tpu_custom_call.1} parent=23 // pred_check_branch
          %147 = sbr.rel (%p145) target = $region28
        $region27: #{tpu_custom_call.1} parent=23 // pred_region
          %s148 = sand.u32 %s26, 1
          %s149 = scalar_lea.sflag [#allocation4], %s148
          %s150 = sand.u32 %s26, 1
          %s151 = smul.addr %s150, 128
          %s152 = scalar_lea.vmem [#allocation3], %s151
          %s154 = ssub.s32 2048, 2048
          %155 = vsyncadd %s149, %s154
          %s156 = smul.addr %s16, 16
          %s157 = smul.addr %s156, 128
          %s158 = scalar_lea.hbm %s0, %s157
          %s159 = sshll.u32 %s152, 4
          %s160 = int_to_ptr.vmem [resolvable:$true] %s159
          %165 = dma.hbm_to_vmem [thread:$0]  %s158, 2048, %s160, %s149, 128, 128, 8
        $region28: #{tpu_custom_call.1} parent=23 // pred_fallthru
          _
      $region24: #{tpu_custom_call.1} parent=5 // pred_fallthru
        _
      %p166 = scmp.le.s32.totalorder 1, %s16
      %p167 = scmp.lt.s32.totalorder %s16, 3
      %p168 = pnand %p166, %p167
      %p169 = pneg %p168
      // Predicated region
      $region29: #{tpu_custom_call.1} parent=5 // pred_check
        _
      $region30: #{tpu_custom_call.1} parent=5 // pred_check_branch
        %171 = sbr.rel (%p168) target = $region32
      $region31: #{tpu_custom_call.1} parent=5 // pred_region
        %s172 = ssub.s32 %s16, 1
        %s173 = sand.u32 %s29, 1
        %s174 = scalar_lea.sflag [#allocation4], %s173
        %s175 = sand.u32 %s29, 1
        %s176 = smul.addr %s175, 128
        %s177 = scalar_lea.vmem [#allocation3], %s176
        // Predicated region
        $region33: #{tpu_custom_call.1} parent=31 // pred_check
          %p178 = pneg %p42
        $region34: #{tpu_custom_call.1} parent=31 // pred_check_branch
          %180 = sbr.rel (%p178) target = $region36
        $region35: #{tpu_custom_call.1} parent=31 // pred_region
          %181 = dma.done %s174, 2048
        $region36: #{tpu_custom_call.1} parent=31 // pred_fallthru
          _
        // Predicated region
        $region37: #{tpu_custom_call.1} parent=31 // pred_check
          %p182 = pneg %p63
        $region38: #{tpu_custom_call.1} parent=31 // pred_check_branch
          %184 = sbr.rel (%p182) target = $region40
        $region39: #{tpu_custom_call.1} parent=31 // pred_region
          %185 = dma.done [#allocation7], 256
        $region40: #{tpu_custom_call.1} parent=31 // pred_fallthru
          _
        %s186 = sand.u32 %s29, 1
        %s187 = scalar_lea.sflag [#allocation4], %s186
        %s188 = sand.u32 %s29, 1
        %s189 = smul.addr %s188, 128
        %s190 = scalar_lea.vmem [#allocation3], %s189
        %p191 = pneg %p42
        %p192 = pneg %p39
        %p193 = pneg %p63
        %p194 = pneg %p60
        %p195 = pneg %p84
        %p196 = pneg %p81
        %p197 = pneg %p110
        %p198 = pneg %p107
        %s199 = sand.u32 %s97, 1
        %s200 = scalar_lea.sflag [#allocation5], %s199
        %s201 = sand.u32 %s97, 1
        %s202 = smul.addr %s201, 128
        %s203 = scalar_lea.vmem [#allocation8], %s202
        %204 = vst [vmem:[#allocation2] sm:$0xff] 0.0
        %205 = vst [vmem:[#allocation2 + $0x8] sm:$0xff] 0.0
        %206 = vst [vmem:[#allocation2 + $0x10] sm:$0xff] 0.0
        %207 = vst [vmem:[#allocation2 + $0x18] sm:$0xff] 0.0
        %208 = vst [vmem:[#allocation2 + $0x20] sm:$0xff] 0.0
        %209 = vst [vmem:[#allocation2 + $0x28] sm:$0xff] 0.0
        %210 = vst [vmem:[#allocation2 + $0x30] sm:$0xff] 0.0
        %211 = vst [vmem:[#allocation2 + $0x38] sm:$0xff] 0.0
        %212 = vst [vmem:[#allocation2 + $0x40] sm:$0xff] 0.0
        %213 = vst [vmem:[#allocation2 + $0x48] sm:$0xff] 0.0
        %214 = vst [vmem:[#allocation2 + $0x50] sm:$0xff] 0.0
        %215 = vst [vmem:[#allocation2 + $0x58] sm:$0xff] 0.0
        %216 = vst [vmem:[#allocation2 + $0x60] sm:$0xff] 0.0
        %217 = vst [vmem:[#allocation2 + $0x68] sm:$0xff] 0.0
        %218 = vst [vmem:[#allocation2 + $0x70] sm:$0xff] 0.0
        %219 = vst [vmem:[#allocation2 + $0x78] sm:$0xff] 0.0
        %220 = vst [vmem:[#allocation2 + $0x80] sm:$0xff] 0.0
        %221 = vst [vmem:[#allocation2 + $0x88] sm:$0xff] 0.0
        %222 = vst [vmem:[#allocation2 + $0x90] sm:$0xff] 0.0
        %223 = vst [vmem:[#allocation2 + $0x98] sm:$0xff] 0.0
        %224 = vst [vmem:[#allocation2 + $0xa0] sm:$0xff] 0.0
        %225 = vst [vmem:[#allocation2 + $0xa8] sm:$0xff] 0.0
        %226 = vst [vmem:[#allocation2 + $0xb0] sm:$0xff] 0.0
        %227 = vst [vmem:[#allocation2 + $0xb8] sm:$0xff] 0.0
        %228 = vst [vmem:[#allocation2 + $0xc0] sm:$0xff] 0.0
        %229 = vst [vmem:[#allocation2 + $0xc8] sm:$0xff] 0.0
        %230 = vst [vmem:[#allocation2 + $0xd0] sm:$0xff] 0.0
        %231 = vst [vmem:[#allocation2 + $0xd8] sm:$0xff] 0.0
        %232 = vst [vmem:[#allocation2 + $0xe0] sm:$0xff] 0.0
        %233 = vst [vmem:[#allocation2 + $0xe8] sm:$0xff] 0.0
        %234 = vst [vmem:[#allocation2 + $0xf0] sm:$0xff] 0.0
        %235 = vst [vmem:[#allocation2 + $0xf8] sm:$0xff] 0.0
        %236 = vst [vmem:[#allocation2 + $0x100] sm:$0xff] 0.0
        %237 = vst [vmem:[#allocation2 + $0x108] sm:$0xff] 0.0
        %238 = vst [vmem:[#allocation2 + $0x110] sm:$0xff] 0.0
        %239 = vst [vmem:[#allocation2 + $0x118] sm:$0xff] 0.0
        %240 = vst [vmem:[#allocation2 + $0x120] sm:$0xff] 0.0
        %241 = vst [vmem:[#allocation2 + $0x128] sm:$0xff] 0.0
        %242 = vst [vmem:[#allocation2 + $0x130] sm:$0xff] 0.0
        %243 = vst [vmem:[#allocation2 + $0x138] sm:$0xff] 0.0
        %v244 = vld [vmem:[#allocation6] sm:$0xff]
        %v245 = vld [vmem:[#allocation6 + $0x8] sm:$0x1]
        %v246 = vld [vmem:[%s2] sm:$0x1]
        %v247 = vld [vmem:[%s177] sm:$0xff]
        %v248 = vld [vmem:[%s177 + $0x8] sm:$0xff]
        %v249 = vld [vmem:[%s177 + $0x10] sm:$0xff]
        %v250 = vld [vmem:[%s177 + $0x18] sm:$0xff]
        %v251 = vld [vmem:[%s177 + $0x20] sm:$0xff]
        %v252 = vld [vmem:[%s177 + $0x28] sm:$0xff]
        %v253 = vld [vmem:[%s177 + $0x30] sm:$0xff]
        %v254 = vld [vmem:[%s177 + $0x38] sm:$0xff]
        %v255 = vld [vmem:[%s177 + $0x40] sm:$0xff]
        %v256 = vld [vmem:[%s177 + $0x48] sm:$0xff]
        %v257 = vld [vmem:[%s177 + $0x50] sm:$0xff]
        %v258 = vld [vmem:[%s177 + $0x58] sm:$0xff]
        %v259 = vld [vmem:[%s177 + $0x60] sm:$0xff]
        %v260 = vld [vmem:[%s177 + $0x68] sm:$0xff]
        %v261 = vld [vmem:[%s177 + $0x70] sm:$0xff]
        %v262 = vld [vmem:[%s177 + $0x78] sm:$0xff]
        %s263 = scalar_lea.vmem [#allocation2], 32
        %264 = vst [vmem:[%s263 + $0x8] sm:$0xff] %v247
        %265 = vst [vmem:[%s263 + $0x10] sm:$0xff] %v248
        %266 = vst [vmem:[%s263 + $0x28] sm:$0xff] %v249
        %267 = vst [vmem:[%s263 + $0x30] sm:$0xff] %v250
        %268 = vst [vmem:[%s263 + $0x48] sm:$0xff] %v251
        %269 = vst [vmem:[%s263 + $0x50] sm:$0xff] %v252
        %270 = vst [vmem:[%s263 + $0x68] sm:$0xff] %v253
        %271 = vst [vmem:[%s263 + $0x70] sm:$0xff] %v254
        %272 = vst [vmem:[%s263 + $0x88] sm:$0xff] %v255
        %273 = vst [vmem:[%s263 + $0x90] sm:$0xff] %v256
        %274 = vst [vmem:[%s263 + $0xa8] sm:$0xff] %v257
        %275 = vst [vmem:[%s263 + $0xb0] sm:$0xff] %v258
        %276 = vst [vmem:[%s263 + $0xc8] sm:$0xff] %v259
        %277 = vst [vmem:[%s263 + $0xd0] sm:$0xff] %v260
        %278 = vst [vmem:[%s263 + $0xe8] sm:$0xff] %v261
        %279 = vst [vmem:[%s263 + $0xf0] sm:$0xff] %v262
        %v281 = vlaneseq
        %v282 = vshrl.u32 %v281, 7
        %v283 = vsub.s32 0, %v282
        %v284 = vrot.slane %v246, %v283
        %v286 = vld [vmem:[#allocation2 + $0x7] sm:$0xff]
        %v287 = vld [vmem:[#allocation2 + $0xf] sm:$0xff]
        %v288 = vld [vmem:[#allocation2 + $0x27] sm:$0xff]
        %v289 = vld [vmem:[#allocation2 + $0x2f] sm:$0xff]
        %v290 = vld [vmem:[#allocation2 + $0x47] sm:$0xff]
        %v291 = vld [vmem:[#allocation2 + $0x4f] sm:$0xff]
        %v292 = vld [vmem:[#allocation2 + $0x67] sm:$0xff]
        %v293 = vld [vmem:[#allocation2 + $0x6f] sm:$0xff]
        %v294 = vld [vmem:[#allocation2 + $0x87] sm:$0xff]
        %v295 = vld [vmem:[#allocation2 + $0x8f] sm:$0xff]
        %v296 = vld [vmem:[#allocation2 + $0xa7] sm:$0xff]
        %v297 = vld [vmem:[#allocation2 + $0xaf] sm:$0xff]
        %v298 = vld [vmem:[#allocation2 + $0xc7] sm:$0xff]
        %v299 = vld [vmem:[#allocation2 + $0xcf] sm:$0xff]
        %v300 = vld [vmem:[#allocation2 + $0xe7] sm:$0xff]
        %v301 = vld [vmem:[#allocation2 + $0xef] sm:$0xff]
        %v302 = vlaneseq
        %v303 = vshrl.u32 %v302, 7
        %v304 = vsub.s32 0, %v303
        %v305 = vrot.slane %v244, %v304
        %v306 = vmul.f32 %v286, %v305
        %v307 = vmul.f32 %v287, %v305
        %v308 = vmul.f32 %v288, %v305
        %v309 = vmul.f32 %v289, %v305
        %v310 = vmul.f32 %v290, %v305
        %v311 = vmul.f32 %v291, %v305
        %v312 = vmul.f32 %v292, %v305
        %v313 = vmul.f32 %v293, %v305
        %v314 = vmul.f32 %v294, %v305
        %v315 = vmul.f32 %v295, %v305
        %v316 = vmul.f32 %v296, %v305
        %v317 = vmul.f32 %v297, %v305
        %v318 = vmul.f32 %v298, %v305
        %v319 = vmul.f32 %v299, %v305
        %v320 = vmul.f32 %v300, %v305
        %v321 = vmul.f32 %v301, %v305
        %v322 = vadd.f32 %v284, %v306
        %v323 = vadd.f32 %v284, %v307
        %v324 = vadd.f32 %v284, %v308
        %v325 = vadd.f32 %v284, %v309
        %v326 = vadd.f32 %v284, %v310
        %v327 = vadd.f32 %v284, %v311
        %v328 = vadd.f32 %v284, %v312
        %v329 = vadd.f32 %v284, %v313
        %v330 = vadd.f32 %v284, %v314
        %v331 = vadd.f32 %v284, %v315
        %v332 = vadd.f32 %v284, %v316
        %v333 = vadd.f32 %v284, %v317
        %v334 = vadd.f32 %v284, %v318
        %v335 = vadd.f32 %v284, %v319
        %v336 = vadd.f32 %v284, %v320
        %v337 = vadd.f32 %v284, %v321
        %v338 = vld [vmem:[#allocation2 + $0x8] sm:$0xff]
        %v339 = vld [vmem:[#allocation2 + $0x10] sm:$0xff]
        %v340 = vld [vmem:[#allocation2 + $0x28] sm:$0xff]
        %v341 = vld [vmem:[#allocation2 + $0x30] sm:$0xff]
        %v342 = vld [vmem:[#allocation2 + $0x48] sm:$0xff]
        %v343 = vld [vmem:[#allocation2 + $0x50] sm:$0xff]
        %v344 = vld [vmem:[#allocation2 + $0x68] sm:$0xff]
        %v345 = vld [vmem:[#allocation2 + $0x70] sm:$0xff]
        %v346 = vld [vmem:[#allocation2 + $0x88] sm:$0xff]
        %v347 = vld [vmem:[#allocation2 + $0x90] sm:$0xff]
        %v348 = vld [vmem:[#allocation2 + $0xa8] sm:$0xff]
        %v349 = vld [vmem:[#allocation2 + $0xb0] sm:$0xff]
        %v350 = vld [vmem:[#allocation2 + $0xc8] sm:$0xff]
        %v351 = vld [vmem:[#allocation2 + $0xd0] sm:$0xff]
        %v352 = vld [vmem:[#allocation2 + $0xe8] sm:$0xff]
        %v353 = vld [vmem:[#allocation2 + $0xf0] sm:$0xff]
        %v354 = vlaneseq
        %v355 = vshrl.u32 %v354, 7
        %v356 = vsub.s32 1, %v355
        %v357 = vrot.slane %v244, %v356
        %v358 = vmul.f32 %v338, %v357
        %v359 = vmul.f32 %v339, %v357
        %v360 = vmul.f32 %v340, %v357
        %v361 = vmul.f32 %v341, %v357
        %v362 = vmul.f32 %v342, %v357
        %v363 = vmul.f32 %v343, %v357
        %v364 = vmul.f32 %v344, %v357
        %v365 = vmul.f32 %v345, %v357
        %v366 = vmul.f32 %v346, %v357
        %v367 = vmul.f32 %v347, %v357
        %v368 = vmul.f32 %v348, %v357
        %v369 = vmul.f32 %v349, %v357
        %v370 = vmul.f32 %v350, %v357
        %v371 = vmul.f32 %v351, %v357
        %v372 = vmul.f32 %v352, %v357
        %v373 = vmul.f32 %v353, %v357
        %v374 = vadd.f32 %v322, %v358
        %v375 = vadd.f32 %v323, %v359
        %v376 = vadd.f32 %v324, %v360
        %v377 = vadd.f32 %v325, %v361
        %v378 = vadd.f32 %v326, %v362
        %v379 = vadd.f32 %v327, %v363
        %v380 = vadd.f32 %v328, %v364
        %v381 = vadd.f32 %v329, %v365
        %v382 = vadd.f32 %v330, %v366
        %v383 = vadd.f32 %v331, %v367
        %v384 = vadd.f32 %v332, %v368
        %v385 = vadd.f32 %v333, %v369
        %v386 = vadd.f32 %v334, %v370
        %v387 = vadd.f32 %v335, %v371
        %v388 = vadd.f32 %v336, %v372
        %v389 = vadd.f32 %v337, %v373
        %v390 = vld [vmem:[#allocation2 + $0x9] sm:$0xff]
        %v391 = vld [vmem:[#allocation2 + $0x11] sm:$0xff]
        %v392 = vld [vmem:[#allocation2 + $0x29] sm:$0xff]
        %v393 = vld [vmem:[#allocation2 + $0x31] sm:$0xff]
        %v394 = vld [vmem:[#allocation2 + $0x49] sm:$0xff]
        %v395 = vld [vmem:[#allocation2 + $0x51] sm:$0xff]
        %v396 = vld [vmem:[#allocation2 + $0x69] sm:$0xff]
        %v397 = vld [vmem:[#allocation2 + $0x71] sm:$0xff]
        %v398 = vld [vmem:[#allocation2 + $0x89] sm:$0xff]
        %v399 = vld [vmem:[#allocation2 + $0x91] sm:$0xff]
        %v400 = vld [vmem:[#allocation2 + $0xa9] sm:$0xff]
        %v401 = vld [vmem:[#allocation2 + $0xb1] sm:$0xff]
        %v402 = vld [vmem:[#allocation2 + $0xc9] sm:$0xff]
        %v403 = vld [vmem:[#allocation2 + $0xd1] sm:$0xff]
        %v404 = vld [vmem:[#allocation2 + $0xe9] sm:$0xff]
        %v405 = vld [vmem:[#allocation2 + $0xf1] sm:$0xff]
        %v406 = vlaneseq
        %v407 = vshrl.u32 %v406, 7
        %v408 = vsub.s32 2, %v407
        %v409 = vrot.slane %v244, %v408
        %v410 = vmul.f32 %v390, %v409
        %v411 = vmul.f32 %v391, %v409
        %v412 = vmul.f32 %v392, %v409
        %v413 = vmul.f32 %v393, %v409
        %v414 = vmul.f32 %v394, %v409
        %v415 = vmul.f32 %v395, %v409
        %v416 = vmul.f32 %v396, %v409
        %v417 = vmul.f32 %v397, %v409
        %v418 = vmul.f32 %v398, %v409
        %v419 = vmul.f32 %v399, %v409
        %v420 = vmul.f32 %v400, %v409
        %v421 = vmul.f32 %v401, %v409
        %v422 = vmul.f32 %v402, %v409
        %v423 = vmul.f32 %v403, %v409
        %v424 = vmul.f32 %v404, %v409
        %v425 = vmul.f32 %v405, %v409
        %v426 = vadd.f32 %v374, %v410
        %v427 = vadd.f32 %v375, %v411
        %v428 = vadd.f32 %v376, %v412
        %v429 = vadd.f32 %v377, %v413
        %v430 = vadd.f32 %v378, %v414
        %v431 = vadd.f32 %v379, %v415
        %v432 = vadd.f32 %v380, %v416
        %v433 = vadd.f32 %v381, %v417
        %v434 = vadd.f32 %v382, %v418
        %v435 = vadd.f32 %v383, %v419
        %v436 = vadd.f32 %v384, %v420
        %v437 = vadd.f32 %v385, %v421
        %v438 = vadd.f32 %v386, %v422
        %v439 = vadd.f32 %v387, %v423
        %v440 = vadd.f32 %v388, %v424
        %v441 = vadd.f32 %v389, %v425
        %v442 = vld [vmem:[%s263 + $0x7] sm:$0xff]
        %v443 = vld [vmem:[%s263 + $0xf] sm:$0xff]
        %v444 = vld [vmem:[%s263 + $0x27] sm:$0xff]
        %v445 = vld [vmem:[%s263 + $0x2f] sm:$0xff]
        %v446 = vld [vmem:[%s263 + $0x47] sm:$0xff]
        %v447 = vld [vmem:[%s263 + $0x4f] sm:$0xff]
        %v448 = vld [vmem:[%s263 + $0x67] sm:$0xff]
        %v449 = vld [vmem:[%s263 + $0x6f] sm:$0xff]
        %v450 = vld [vmem:[%s263 + $0x87] sm:$0xff]
        %v451 = vld [vmem:[%s263 + $0x8f] sm:$0xff]
        %v452 = vld [vmem:[%s263 + $0xa7] sm:$0xff]
        %v453 = vld [vmem:[%s263 + $0xaf] sm:$0xff]
        %v454 = vld [vmem:[%s263 + $0xc7] sm:$0xff]
        %v455 = vld [vmem:[%s263 + $0xcf] sm:$0xff]
        %v456 = vld [vmem:[%s263 + $0xe7] sm:$0xff]
        %v457 = vld [vmem:[%s263 + $0xef] sm:$0xff]
        %v458 = vlaneseq
        %v459 = vshrl.u32 %v458, 7
        %v460 = vsub.s32 3, %v459
        %v461 = vrot.slane %v244, %v460
        %v462 = vmul.f32 %v442, %v461
        %v463 = vmul.f32 %v443, %v461
        %v464 = vmul.f32 %v444, %v461
        %v465 = vmul.f32 %v445, %v461
        %v466 = vmul.f32 %v446, %v461
        %v467 = vmul.f32 %v447, %v461
        %v468 = vmul.f32 %v448, %v461
        %v469 = vmul.f32 %v449, %v461
        %v470 = vmul.f32 %v450, %v461
        %v471 = vmul.f32 %v451, %v461
        %v472 = vmul.f32 %v452, %v461
        %v473 = vmul.f32 %v453, %v461
        %v474 = vmul.f32 %v454, %v461
        %v475 = vmul.f32 %v455, %v461
        %v476 = vmul.f32 %v456, %v461
        %v477 = vmul.f32 %v457, %v461
        %v478 = vadd.f32 %v426, %v462
        %v479 = vadd.f32 %v427, %v463
        %v480 = vadd.f32 %v428, %v464
        %v481 = vadd.f32 %v429, %v465
        %v482 = vadd.f32 %v430, %v466
        %v483 = vadd.f32 %v431, %v467
        %v484 = vadd.f32 %v432, %v468
        %v485 = vadd.f32 %v433, %v469
        %v486 = vadd.f32 %v434, %v470
        %v487 = vadd.f32 %v435, %v471
        %v488 = vadd.f32 %v436, %v472
        %v489 = vadd.f32 %v437, %v473
        %v490 = vadd.f32 %v438, %v474
        %v491 = vadd.f32 %v439, %v475
        %v492 = vadd.f32 %v440, %v476
        %v493 = vadd.f32 %v441, %v477
        %v494 = vld [vmem:[%s263 + $0x8] sm:$0xff]
        %v495 = vld [vmem:[%s263 + $0x10] sm:$0xff]
        %v496 = vld [vmem:[%s263 + $0x28] sm:$0xff]
        %v497 = vld [vmem:[%s263 + $0x30] sm:$0xff]
        %v498 = vld [vmem:[%s263 + $0x48] sm:$0xff]
        %v499 = vld [vmem:[%s263 + $0x50] sm:$0xff]
        %v500 = vld [vmem:[%s263 + $0x68] sm:$0xff]
        %v501 = vld [vmem:[%s263 + $0x70] sm:$0xff]
        %v502 = vld [vmem:[%s263 + $0x88] sm:$0xff]
        %v503 = vld [vmem:[%s263 + $0x90] sm:$0xff]
        %v504 = vld [vmem:[%s263 + $0xa8] sm:$0xff]
        %v505 = vld [vmem:[%s263 + $0xb0] sm:$0xff]
        %v506 = vld [vmem:[%s263 + $0xc8] sm:$0xff]
        %v507 = vld [vmem:[%s263 + $0xd0] sm:$0xff]
        %v508 = vld [vmem:[%s263 + $0xe8] sm:$0xff]
        %v509 = vld [vmem:[%s263 + $0xf0] sm:$0xff]
        %v510 = vlaneseq
        %v511 = vshrl.u32 %v510, 7
        %v512 = vsub.s32 4, %v511
        %v513 = vrot.slane %v244, %v512
        %v514 = vmul.f32 %v494, %v513
        %v515 = vmul.f32 %v495, %v513
        %v516 = vmul.f32 %v496, %v513
        %v517 = vmul.f32 %v497, %v513
        %v518 = vmul.f32 %v498, %v513
        %v519 = vmul.f32 %v499, %v513
        %v520 = vmul.f32 %v500, %v513
        %v521 = vmul.f32 %v501, %v513
        %v522 = vmul.f32 %v502, %v513
        %v523 = vmul.f32 %v503, %v513
        %v524 = vmul.f32 %v504, %v513
        %v525 = vmul.f32 %v505, %v513
        %v526 = vmul.f32 %v506, %v513
        %v527 = vmul.f32 %v507, %v513
        %v528 = vmul.f32 %v508, %v513
        %v529 = vmul.f32 %v509, %v513
        %v530 = vadd.f32 %v478, %v514
        %v531 = vadd.f32 %v479, %v515
        %v532 = vadd.f32 %v480, %v516
        %v533 = vadd.f32 %v481, %v517
        %v534 = vadd.f32 %v482, %v518
        %v535 = vadd.f32 %v483, %v519
        %v536 = vadd.f32 %v484, %v520
        %v537 = vadd.f32 %v485, %v521
        %v538 = vadd.f32 %v486, %v522
        %v539 = vadd.f32 %v487, %v523
        %v540 = vadd.f32 %v488, %v524
        %v541 = vadd.f32 %v489, %v525
        %v542 = vadd.f32 %v490, %v526
        %v543 = vadd.f32 %v491, %v527
        %v544 = vadd.f32 %v492, %v528
        %v545 = vadd.f32 %v493, %v529
        %v546 = vld [vmem:[%s263 + $0x9] sm:$0xff]
        %v547 = vld [vmem:[%s263 + $0x11] sm:$0xff]
        %v548 = vld [vmem:[%s263 + $0x29] sm:$0xff]
        %v549 = vld [vmem:[%s263 + $0x31] sm:$0xff]
        %v550 = vld [vmem:[%s263 + $0x49] sm:$0xff]
        %v551 = vld [vmem:[%s263 + $0x51] sm:$0xff]
        %v552 = vld [vmem:[%s263 + $0x69] sm:$0xff]
        %v553 = vld [vmem:[%s263 + $0x71] sm:$0xff]
        %v554 = vld [vmem:[%s263 + $0x89] sm:$0xff]
        %v555 = vld [vmem:[%s263 + $0x91] sm:$0xff]
        %v556 = vld [vmem:[%s263 + $0xa9] sm:$0xff]
        %v557 = vld [vmem:[%s263 + $0xb1] sm:$0xff]
        %v558 = vld [vmem:[%s263 + $0xc9] sm:$0xff]
        %v559 = vld [vmem:[%s263 + $0xd1] sm:$0xff]
        %v560 = vld [vmem:[%s263 + $0xe9] sm:$0xff]
        %v561 = vld [vmem:[%s263 + $0xf1] sm:$0xff]
        %v562 = vlaneseq
        %v563 = vshrl.u32 %v562, 7
        %v564 = vsub.s32 5, %v563
        %v565 = vrot.slane %v244, %v564
        %v566 = vmul.f32 %v546, %v565
        %v567 = vmul.f32 %v547, %v565
        %v568 = vmul.f32 %v548, %v565
        %v569 = vmul.f32 %v549, %v565
        %v570 = vmul.f32 %v550, %v565
        %v571 = vmul.f32 %v551, %v565
        %v572 = vmul.f32 %v552, %v565
        %v573 = vmul.f32 %v553, %v565
        %v574 = vmul.f32 %v554, %v565
        %v575 = vmul.f32 %v555, %v565
        %v576 = vmul.f32 %v556, %v565
        %v577 = vmul.f32 %v557, %v565
        %v578 = vmul.f32 %v558, %v565
        %v579 = vmul.f32 %v559, %v565
        %v580 = vmul.f32 %v560, %v565
        %v581 = vmul.f32 %v561, %v565
        %v582 = vadd.f32 %v530, %v566
        %v583 = vadd.f32 %v531, %v567
        %v584 = vadd.f32 %v532, %v568
        %v585 = vadd.f32 %v533, %v569
        %v586 = vadd.f32 %v534, %v570
        %v587 = vadd.f32 %v535, %v571
        %v588 = vadd.f32 %v536, %v572
        %v589 = vadd.f32 %v537, %v573
        %v590 = vadd.f32 %v538, %v574
        %v591 = vadd.f32 %v539, %v575
        %v592 = vadd.f32 %v540, %v576
        %v593 = vadd.f32 %v541, %v577
        %v594 = vadd.f32 %v542, %v578
        %v595 = vadd.f32 %v543, %v579
        %v596 = vadd.f32 %v544, %v580
        %v597 = vadd.f32 %v545, %v581
        %s598 = scalar_lea.vmem [#allocation2], 64
        %v599 = vld [vmem:[%s598 + $0x7] sm:$0xff]
        %v600 = vld [vmem:[%s598 + $0xf] sm:$0xff]
        %v601 = vld [vmem:[%s598 + $0x27] sm:$0xff]
        %v602 = vld [vmem:[%s598 + $0x2f] sm:$0xff]
        %v603 = vld [vmem:[%s598 + $0x47] sm:$0xff]
        %v604 = vld [vmem:[%s598 + $0x4f] sm:$0xff]
        %v605 = vld [vmem:[%s598 + $0x67] sm:$0xff]
        %v606 = vld [vmem:[%s598 + $0x6f] sm:$0xff]
        %v607 = vld [vmem:[%s598 + $0x87] sm:$0xff]
        %v608 = vld [vmem:[%s598 + $0x8f] sm:$0xff]
        %v609 = vld [vmem:[%s598 + $0xa7] sm:$0xff]
        %v610 = vld [vmem:[%s598 + $0xaf] sm:$0xff]
        %v611 = vld [vmem:[%s598 + $0xc7] sm:$0xff]
        %v612 = vld [vmem:[%s598 + $0xcf] sm:$0xff]
        %v613 = vld [vmem:[%s598 + $0xe7] sm:$0xff]
        %v614 = vld [vmem:[%s598 + $0xef] sm:$0xff]
        %v615 = vlaneseq
        %v616 = vshrl.u32 %v615, 7
        %v617 = vsub.s32 6, %v616
        %v618 = vrot.slane %v244, %v617
        %v619 = vmul.f32 %v599, %v618
        %v620 = vmul.f32 %v600, %v618
        %v621 = vmul.f32 %v601, %v618
        %v622 = vmul.f32 %v602, %v618
        %v623 = vmul.f32 %v603, %v618
        %v624 = vmul.f32 %v604, %v618
        %v625 = vmul.f32 %v605, %v618
        %v626 = vmul.f32 %v606, %v618
        %v627 = vmul.f32 %v607, %v618
        %v628 = vmul.f32 %v608, %v618
        %v629 = vmul.f32 %v609, %v618
        %v630 = vmul.f32 %v610, %v618
        %v631 = vmul.f32 %v611, %v618
        %v632 = vmul.f32 %v612, %v618
        %v633 = vmul.f32 %v613, %v618
        %v634 = vmul.f32 %v614, %v618
        %v635 = vadd.f32 %v582, %v619
        %v636 = vadd.f32 %v583, %v620
        %v637 = vadd.f32 %v584, %v621
        %v638 = vadd.f32 %v585, %v622
        %v639 = vadd.f32 %v586, %v623
        %v640 = vadd.f32 %v587, %v624
        %v641 = vadd.f32 %v588, %v625
        %v642 = vadd.f32 %v589, %v626
        %v643 = vadd.f32 %v590, %v627
        %v644 = vadd.f32 %v591, %v628
        %v645 = vadd.f32 %v592, %v629
        %v646 = vadd.f32 %v593, %v630
        %v647 = vadd.f32 %v594, %v631
        %v648 = vadd.f32 %v595, %v632
        %v649 = vadd.f32 %v596, %v633
        %v650 = vadd.f32 %v597, %v634
        %v651 = vld [vmem:[%s598 + $0x8] sm:$0xff]
        %v652 = vld [vmem:[%s598 + $0x10] sm:$0xff]
        %v653 = vld [vmem:[%s598 + $0x28] sm:$0xff]
        %v654 = vld [vmem:[%s598 + $0x30] sm:$0xff]
        %v655 = vld [vmem:[%s598 + $0x48] sm:$0xff]
        %v656 = vld [vmem:[%s598 + $0x50] sm:$0xff]
        %v657 = vld [vmem:[%s598 + $0x68] sm:$0xff]
        %v658 = vld [vmem:[%s598 + $0x70] sm:$0xff]
        %v659 = vld [vmem:[%s598 + $0x88] sm:$0xff]
        %v660 = vld [vmem:[%s598 + $0x90] sm:$0xff]
        %v661 = vld [vmem:[%s598 + $0xa8] sm:$0xff]
        %v662 = vld [vmem:[%s598 + $0xb0] sm:$0xff]
        %v663 = vld [vmem:[%s598 + $0xc8] sm:$0xff]
        %v664 = vld [vmem:[%s598 + $0xd0] sm:$0xff]
        %v665 = vld [vmem:[%s598 + $0xe8] sm:$0xff]
        %v666 = vld [vmem:[%s598 + $0xf0] sm:$0xff]
        %v667 = vlaneseq
        %v668 = vshrl.u32 %v667, 7
        %v669 = vsub.s32 7, %v668
        %v670 = vrot.slane %v244, %v669
        %v671 = vmul.f32 %v651, %v670
        %v672 = vmul.f32 %v652, %v670
        %v673 = vmul.f32 %v653, %v670
        %v674 = vmul.f32 %v654, %v670
        %v675 = vmul.f32 %v655, %v670
        %v676 = vmul.f32 %v656, %v670
        %v677 = vmul.f32 %v657, %v670
        %v678 = vmul.f32 %v658, %v670
        %v679 = vmul.f32 %v659, %v670
        %v680 = vmul.f32 %v660, %v670
        %v681 = vmul.f32 %v661, %v670
        %v682 = vmul.f32 %v662, %v670
        %v683 = vmul.f32 %v663, %v670
        %v684 = vmul.f32 %v664, %v670
        %v685 = vmul.f32 %v665, %v670
        %v686 = vmul.f32 %v666, %v670
        %v687 = vadd.f32 %v635, %v671
        %v688 = vadd.f32 %v636, %v672
        %v689 = vadd.f32 %v637, %v673
        %v690 = vadd.f32 %v638, %v674
        %v691 = vadd.f32 %v639, %v675
        %v692 = vadd.f32 %v640, %v676
        %v693 = vadd.f32 %v641, %v677
        %v694 = vadd.f32 %v642, %v678
        %v695 = vadd.f32 %v643, %v679
        %v696 = vadd.f32 %v644, %v680
        %v697 = vadd.f32 %v645, %v681
        %v698 = vadd.f32 %v646, %v682
        %v699 = vadd.f32 %v647, %v683
        %v700 = vadd.f32 %v648, %v684
        %v701 = vadd.f32 %v649, %v685
        %v702 = vadd.f32 %v650, %v686
        %v703 = vld [vmem:[%s598 + $0x9] sm:$0xff]
        %v704 = vld [vmem:[%s598 + $0x11] sm:$0xff]
        %v705 = vld [vmem:[%s598 + $0x29] sm:$0xff]
        %v706 = vld [vmem:[%s598 + $0x31] sm:$0xff]
        %v707 = vld [vmem:[%s598 + $0x49] sm:$0xff]
        %v708 = vld [vmem:[%s598 + $0x51] sm:$0xff]
        %v709 = vld [vmem:[%s598 + $0x69] sm:$0xff]
        %v710 = vld [vmem:[%s598 + $0x71] sm:$0xff]
        %v711 = vld [vmem:[%s598 + $0x89] sm:$0xff]
        %v712 = vld [vmem:[%s598 + $0x91] sm:$0xff]
        %v713 = vld [vmem:[%s598 + $0xa9] sm:$0xff]
        %v714 = vld [vmem:[%s598 + $0xb1] sm:$0xff]
        %v715 = vld [vmem:[%s598 + $0xc9] sm:$0xff]
        %v716 = vld [vmem:[%s598 + $0xd1] sm:$0xff]
        %v717 = vld [vmem:[%s598 + $0xe9] sm:$0xff]
        %v718 = vld [vmem:[%s598 + $0xf1] sm:$0xff]
        %v719 = vlaneseq
        %v720 = vshrl.u32 %v719, 7
        %v721 = vsub.s32 0, %v720
        %v722 = vrot.slane %v245, %v721
        %v723 = vmul.f32 %v703, %v722
        %v724 = vmul.f32 %v704, %v722
        %v725 = vmul.f32 %v705, %v722
        %v726 = vmul.f32 %v706, %v722
        %v727 = vmul.f32 %v707, %v722
        %v728 = vmul.f32 %v708, %v722
        %v729 = vmul.f32 %v709, %v722
        %v730 = vmul.f32 %v710, %v722
        %v731 = vmul.f32 %v711, %v722
        %v732 = vmul.f32 %v712, %v722
        %v733 = vmul.f32 %v713, %v722
        %v734 = vmul.f32 %v714, %v722
        %v735 = vmul.f32 %v715, %v722
        %v736 = vmul.f32 %v716, %v722
        %v737 = vmul.f32 %v717, %v722
        %v738 = vmul.f32 %v718, %v722
        %v739 = vadd.f32 %v687, %v723
        %v740 = vadd.f32 %v688, %v724
        %v741 = vadd.f32 %v689, %v725
        %v742 = vadd.f32 %v690, %v726
        %v743 = vadd.f32 %v691, %v727
        %v744 = vadd.f32 %v692, %v728
        %v745 = vadd.f32 %v693, %v729
        %v746 = vadd.f32 %v694, %v730
        %v747 = vadd.f32 %v695, %v731
        %v748 = vadd.f32 %v696, %v732
        %v749 = vadd.f32 %v697, %v733
        %v750 = vadd.f32 %v698, %v734
        %v751 = vadd.f32 %v699, %v735
        %v752 = vadd.f32 %v700, %v736
        %v753 = vadd.f32 %v701, %v737
        %v754 = vadd.f32 %v702, %v738
        %755 = vst [vmem:[%s203] sm:$0xff] %v739
        %756 = vst [vmem:[%s203 + $0x8] sm:$0xff] %v740
        %757 = vst [vmem:[%s203 + $0x10] sm:$0xff] %v741
        %758 = vst [vmem:[%s203 + $0x18] sm:$0xff] %v742
        %759 = vst [vmem:[%s203 + $0x20] sm:$0xff] %v743
        %760 = vst [vmem:[%s203 + $0x28] sm:$0xff] %v744
        %761 = vst [vmem:[%s203 + $0x30] sm:$0xff] %v745
        %762 = vst [vmem:[%s203 + $0x38] sm:$0xff] %v746
        %763 = vst [vmem:[%s203 + $0x40] sm:$0xff] %v747
        %764 = vst [vmem:[%s203 + $0x48] sm:$0xff] %v748
        %765 = vst [vmem:[%s203 + $0x50] sm:$0xff] %v749
        %766 = vst [vmem:[%s203 + $0x58] sm:$0xff] %v750
        %767 = vst [vmem:[%s203 + $0x60] sm:$0xff] %v751
        %768 = vst [vmem:[%s203 + $0x68] sm:$0xff] %v752
        %769 = vst [vmem:[%s203 + $0x70] sm:$0xff] %v753
        %770 = vst [vmem:[%s203 + $0x78] sm:$0xff] %v754
        %s771 = sand.u32 %s97, 1
        %s772 = scalar_lea.sflag [#allocation5], %s771
        %s773 = sand.u32 %s97, 1
        %s774 = smul.addr %s773, 128
        %s775 = scalar_lea.vmem [#allocation8], %s774
        // Predicated region
        $region41: #{tpu_custom_call.1} parent=31 // pred_check
          %p776 = pneg %p107
        $region42: #{tpu_custom_call.1} parent=31 // pred_check_branch
          %778 = sbr.rel (%p776) target = $region44
        $region43: #{tpu_custom_call.1} parent=31 // pred_region
          %s780 = ssub.s32 2048, 2048
          %781 = vsyncadd %s772, %s780
          %s782 = smul.addr %s21, 16
          %s783 = smul.addr %s782, 128
          %s784 = scalar_lea.hbm %s3, %s783
          %s785 = sshll.u32 %s775, 4
          %s786 = int_to_ptr.vmem [resolvable:$true] %s785
          %791 = dma.vmem_to_hbm [thread:$0]  %s786, 2048, %s784, %s772, 128, 128, 8
        $region44: #{tpu_custom_call.1} parent=31 // pred_fallthru
          _
      $region32: #{tpu_custom_call.1} parent=5 // pred_fallthru
        _
      %p792 = scmp.le.s32.totalorder 2, %s16
      // Predicated region
      $region45: #{tpu_custom_call.1} parent=5 // pred_check
        %p793 = pneg %p792
      $region46: #{tpu_custom_call.1} parent=5 // pred_check_branch
        %795 = sbr.rel (%p793) target = $region48
      $region47: #{tpu_custom_call.1} parent=5 // pred_region
        %s796 = ssub.s32 %s16, 2
        // Predicated region
        $region49: #{tpu_custom_call.1} parent=47 // pred_check
          %p797 = pneg %p113
        $region50: #{tpu_custom_call.1} parent=47 // pred_check_branch
          %799 = sbr.rel (%p797) target = $region52
        $region51: #{tpu_custom_call.1} parent=47 // pred_region
          %s800 = sand.u32 %s98, 1
          %s801 = scalar_lea.sflag [#allocation5], %s800
          %s802 = sand.u32 %s98, 1
          %s803 = smul.addr %s802, 128
          %s804 = scalar_lea.vmem [#allocation8], %s803
          %805 = dma.done %s801, 2048
        $region52: #{tpu_custom_call.1} parent=47 // pred_fallthru
          _
      $region48: #{tpu_custom_call.1} parent=5 // pred_fallthru
        _
    $region6: #{tpu_custom_call.1} parent=1 // loop_footer
      %s20 = sadd.s32 1, %s16
    $region7: #{tpu_custom_call.1} parent=1 // loop_footer_branch
      %15 = sbr.rel target = $region3
    $region8: #{tpu_custom_call.1} parent=1 // loop_exit
      _
    %806 = vsyncpa [#allocation4], 1
    %s807 = scalar_lea.sflag [#allocation4], 1
    %808 = vsyncpa %s807, 1
    %809 = vsyncpa [#allocation7], 1
    %810 = vsyncpa [#allocation5], 1
    %s811 = scalar_lea.sflag [#allocation5], 1
    %812 = vsyncpa %s811, 1

</llo_original>
